<compile_context>
chip_gen: v5e
topology: v5e:2x2
jax: 0.10.0
libtpu: 0.0.40
codegen_flags: <defaults>
</compile_context>

<pallas_src>
import jax
import jax.numpy as jnp
from jax.experimental import pallas as pl
from jax.experimental.pallas import tpu as pltpu


def mlp_kernel(x_ref, w1_ref, b1_ref, w2_ref, b2_ref, o_ref):
    """One channel-major block [C, T]:  o = x + W2 @ relu(W1 @ x + b1) + b2."""
    xb = x_ref[...].astype(jnp.bfloat16)                       # [C, T] bf16 MXU operand
    z = jnp.dot(w1_ref[...], xb,
                preferred_element_type=jnp.float32) + b1_ref[...]
    z = jnp.maximum(z, 0.0)                                    # ReLU (dropout omitted: eval)
    h = jnp.dot(w2_ref[...], z.astype(jnp.bfloat16),
                preferred_element_type=jnp.float32) + b2_ref[...]
    # Re-read the residual from VMEM (cheap vld) instead of keeping the f32
    # activation tile live across both matmuls -> lower vreg pressure.
    o_ref[...] = (x_ref[...].astype(jnp.float32) + h).astype(o_ref.dtype)


def mlp_forward(x_nchw, w1, b1, w2, b2, *, hw_tile_target=512):
    """x_nchw: [B, C, H, W]; w1/w2: 1x1 conv weights [C_out, C_in] (or
    [C, C, 1, 1]); b1/b2: [C].  Returns [B, C, H, W] in x_nchw's dtype."""
    if w1.ndim == 4:
        w1 = w1.reshape(w1.shape[0], w1.shape[1])
    if w2.ndim == 4:
        w2 = w2.reshape(w2.shape[0], w2.shape[1])
    B, C, H, W = x_nchw.shape
    assert w1.shape == (C, C) and w2.shape == (C, C), "residual needs in==out dims"
    HW = H * W

    # Free reshape: NCHW with a 1x1 kernel is already the layout we want
    # (channels on sublanes, pixels on lanes).  No transpose/pad HBM passes.
    x = x_nchw.reshape(B, C, HW)

    # Spatial tile on the lane axis: full extent when small, otherwise a
    # lane-dense multiple of 128 (ragged last block is safe: pixels are
    # independent, OOB columns are discarded on write).
    T = HW if HW <= hw_tile_target else hw_tile_target
    grid = (B, pl.cdiv(HW, T))

    w1b = w1.astype(jnp.bfloat16)                 # VMEM-resident MXU operands
    w2b = w2.astype(jnp.bfloat16)
    b1c = b1.reshape(C, 1).astype(jnp.float32)    # lane-broadcast bias columns
    b2c = b2.reshape(C, 1).astype(jnp.float32)

    itemsize = x.dtype.itemsize
    cost = pl.CostEstimate(
        flops=4 * B * HW * C * C,                              # two [C,C]x[C,HW] matmuls
        bytes_accessed=2 * B * C * HW * itemsize + 2 * C * C * 2 + 2 * C * 4,
        transcendentals=0,
    )

    out = pl.pallas_call(
        mlp_kernel,
        out_shape=jax.ShapeDtypeStruct((B, C, HW), x.dtype),
        grid_spec=pltpu.PrefetchScalarGridSpec(
            num_scalar_prefetch=0,
            grid=grid,
            in_specs=[
                pl.BlockSpec((None, C, T), lambda b, t: (b, 0, t)),  # streamed activations
                pl.BlockSpec((C, C), lambda b, t: (0, 0)),           # W1 (constant block)
                pl.BlockSpec((C, 1), lambda b, t: (0, 0)),           # b1
                pl.BlockSpec((C, C), lambda b, t: (0, 0)),           # W2 (constant block)
                pl.BlockSpec((C, 1), lambda b, t: (0, 0)),           # b2
            ],
            out_specs=pl.BlockSpec((None, C, T), lambda b, t: (b, 0, t)),
        ),
        compiler_params=pltpu.CompilerParams(
            dimension_semantics=("parallel", "parallel"),
            vmem_limit_bytes=32 * 1024 * 1024,
        ),
        cost_estimate=cost,
        # Same shape/dtype, each block is read before its slot is rewritten:
        # free output-allocation saving when x is dead after the call (XLA
        # inserts a defensive copy otherwise, so it is always correct).
        input_output_aliases={0: 0},
    )(x, w1b, b1c, w2b, b2c)

    return out.reshape(B, C, H, W)


def _reference(x_nchw, w1, b1, w2, b2, *, matmul_dtype):
    """Pure-jnp mirror of the PyTorch forward (eval mode).

    matmul_dtype=bf16 mirrors the kernel's numerics; f32 is the
    PyTorch-precision reference for a looser sanity check.
    """
    B, C, H, W = x_nchw.shape
    x = x_nchw.reshape(B, C, H * W).astype(jnp.float32)
    z = jnp.einsum("oc,bcp->bop", w1.astype(matmul_dtype), x.astype(matmul_dtype),
                   preferred_element_type=jnp.float32) + b1[None, :, None]
    z = jnp.maximum(z, 0.0)
    h = jnp.einsum("oc,bcp->bop", w2.astype(matmul_dtype), z.astype(matmul_dtype),
                   preferred_element_type=jnp.float32) + b2[None, :, None]
    return (x + h).reshape(B, C, H, W).astype(x_nchw.dtype)


def _run_case(key, B, C, H, W):
    k0, k1, k2, k3, k4 = jax.random.split(key, 5)
    x = jax.random.normal(k0, (B, C, H, W), jnp.float32)
    w1 = 0.05 * jax.random.normal(k1, (C, C), jnp.float32)   # conv weight [out, in]
    b1 = 0.05 * jax.random.normal(k2, (C,), jnp.float32)
    w2 = 0.05 * jax.random.normal(k3, (C, C), jnp.float32)
    b2 = 0.05 * jax.random.normal(k4, (C,), jnp.float32)

    # Compute references before the (input-aliased) kernel call.
    ref_bf16 = _reference(x, w1, b1, w2, b2, matmul_dtype=jnp.bfloat16)
    ref_f32 = _reference(x, w1, b1, w2, b2, matmul_dtype=jnp.float32)

    out = jax.block_until_ready(mlp_forward(x, w1, b1, w2, b2))
    assert out.shape == x.shape and out.dtype == x.dtype, (out.shape, out.dtype)
    assert jnp.allclose(out, ref_bf16, atol=2e-3, rtol=2e-3), \
        "mismatch vs bf16-matched reference"
    assert jnp.allclose(out, ref_f32, atol=5e-2, rtol=5e-2), \
        "mismatch vs f32 reference"


if __name__ == "__main__":
    key = jax.random.PRNGKey(0)
    k_a, k_b = jax.random.split(key)

    # Main case: STID encoder width (hidden_dim = 128); HW = 128 lanes, streamed
    # straight from the NCHW layout.
    _run_case(k_a, B=2, C=128, H=16, W=8)

    # Non-128 channel count and STID-style W == 1 spatial layout (HW = 16).
    _run_case(k_b, B=2, C=96, H=16, W=1)

    print("KERNEL_OK")
</pallas_src>

<mosaic_0001>
module attributes {stable_mosaic.version = 11 : i64} {
  func.func @mlp_kernel(%arg0: i32, %arg1: i32, %arg2: memref<1x128x128xf32, #tpu.memory_space<vmem>>, %arg3: memref<128x128xbf16, #tpu.memory_space<vmem>>, %arg4: memref<128x1xf32, #tpu.memory_space<vmem>>, %arg5: memref<128x128xbf16, #tpu.memory_space<vmem>>, %arg6: memref<128x1xf32, #tpu.memory_space<vmem>>, %arg7: memref<1x128x128xf32, #tpu.memory_space<vmem>>) attributes {dimension_semantics = [#tpu.dimension_semantics<parallel>, #tpu.dimension_semantics<parallel>], iteration_bounds = array<i64: 2, 1>, scalar_prefetch = 0 : i64, scratch_operands = 0 : i64, tpu.core_type = #tpu.core_type<tc>, window_params = [{transform_indices = @transform_0, window_bounds = array<i64: 1, 128, 128>}, {pipeline_mode = #tpu.pipeline_mode<synchronous>, transform_indices = @transform_1, window_bounds = array<i64: 128, 128>}, {pipeline_mode = #tpu.pipeline_mode<synchronous>, transform_indices = @transform_2, window_bounds = array<i64: 128, 1>}, {pipeline_mode = #tpu.pipeline_mode<synchronous>, transform_indices = @transform_3, window_bounds = array<i64: 128, 128>}, {pipeline_mode = #tpu.pipeline_mode<synchronous>, transform_indices = @transform_4, window_bounds = array<i64: 128, 1>}, {transform_indices = @transform_5, window_bounds = array<i64: 1, 128, 128>}]} {
    %c0 = arith.constant 0 : index
    %c0_0 = arith.constant 0 : index
    %c0_1 = arith.constant 0 : index
    %0 = vector.load %arg2[%c0, %c0_0, %c0_1] : memref<1x128x128xf32, #tpu.memory_space<vmem>>, vector<1x128x128xf32>
    %1 = vector.shape_cast %0 : vector<1x128x128xf32> to vector<128x128xf32>
    %2 = arith.truncf %1 : vector<128x128xf32> to vector<128x128xbf16>
    %c0_2 = arith.constant 0 : index
    %c0_3 = arith.constant 0 : index
    %3 = vector.load %arg3[%c0_2, %c0_3] : memref<128x128xbf16, #tpu.memory_space<vmem>>, vector<128x128xbf16>
    %cst = arith.constant dense<0.000000e+00> : vector<128x128xf32>
    %4 = tpu.matmul %3, %2, %cst {dimension_numbers = #tpu.dot_dimension_numbers<[1], [0], [0], [1], [0, 0, 1, 1], [], []>} : vector<128x128xbf16>, vector<128x128xbf16>, vector<128x128xf32> -> vector<128x128xf32>
    %c0_4 = arith.constant 0 : index
    %c0_5 = arith.constant 0 : index
    %5 = vector.load %arg4[%c0_4, %c0_5] : memref<128x1xf32, #tpu.memory_space<vmem>>, vector<128x1xf32>
    %6 = vector.broadcast %5 : vector<128x1xf32> to vector<128x128xf32>
    %7 = arith.addf %4, %6 : vector<128x128xf32>
    %cst_6 = arith.constant 0.000000e+00 : f32
    %8 = vector.broadcast %cst_6 : f32 to vector<128x128xf32>
    %9 = arith.maximumf %7, %8 : vector<128x128xf32>
    %c0_7 = arith.constant 0 : index
    %c0_8 = arith.constant 0 : index
    %10 = vector.load %arg5[%c0_7, %c0_8] : memref<128x128xbf16, #tpu.memory_space<vmem>>, vector<128x128xbf16>
    %11 = arith.truncf %9 : vector<128x128xf32> to vector<128x128xbf16>
    %cst_9 = arith.constant dense<0.000000e+00> : vector<128x128xf32>
    %12 = tpu.matmul %10, %11, %cst_9 {dimension_numbers = #tpu.dot_dimension_numbers<[1], [0], [0], [1], [0, 0, 1, 1], [], []>} : vector<128x128xbf16>, vector<128x128xbf16>, vector<128x128xf32> -> vector<128x128xf32>
    %c0_10 = arith.constant 0 : index
    %c0_11 = arith.constant 0 : index
    %13 = vector.load %arg6[%c0_10, %c0_11] : memref<128x1xf32, #tpu.memory_space<vmem>>, vector<128x1xf32>
    %14 = vector.broadcast %13 : vector<128x1xf32> to vector<128x128xf32>
    %15 = arith.addf %12, %14 : vector<128x128xf32>
    %c0_12 = arith.constant 0 : index
    %c0_13 = arith.constant 0 : index
    %c0_14 = arith.constant 0 : index
    %16 = vector.load %arg2[%c0_12, %c0_13, %c0_14] : memref<1x128x128xf32, #tpu.memory_space<vmem>>, vector<1x128x128xf32>
    %17 = vector.shape_cast %16 : vector<1x128x128xf32> to vector<128x128xf32>
    %18 = arith.addf %17, %15 : vector<128x128xf32>
    %c0_15 = arith.constant 0 : index
    %c0_16 = arith.constant 0 : index
    %c0_17 = arith.constant 0 : index
    %19 = vector.load %arg7[%c0_15, %c0_16, %c0_17] : memref<1x128x128xf32, #tpu.memory_space<vmem>>, vector<1x128x128xf32>
    %20 = vector.shape_cast %19 : vector<1x128x128xf32> to vector<128x128xf32>
    %21 = vector.shape_cast %18 : vector<128x128xf32> to vector<1x128x128xf32>
    tpu.vector_store %arg7[%c0_15, %c0_16, %c0_17], %21 {strides = array<i32>} : memref<1x128x128xf32, #tpu.memory_space<vmem>>, vector<1x128x128xf32>,
    return
  }
  func.func @transform_0(%arg0: i32, %arg1: i32) -> (i32, i32, i32) {
    %c0_i32 = arith.constant 0 : i32
    %c0_i32_0 = arith.constant 0 : i32
    return %arg0, %c0_i32, %arg1 : i32, i32, i32
  }
  func.func @transform_1(%arg0: i32, %arg1: i32) -> (i32, i32) {
    %c0_i32 = arith.constant 0 : i32
    %c0_i32_0 = arith.constant 0 : i32
    %c0_i32_1 = arith.constant 0 : i32
    return %c0_i32, %c0_i32_0 : i32, i32
  }
  func.func @transform_2(%arg0: i32, %arg1: i32) -> (i32, i32) {
    %c0_i32 = arith.constant 0 : i32
    %c0_i32_0 = arith.constant 0 : i32
    %c0_i32_1 = arith.constant 0 : i32
    return %c0_i32, %c0_i32_0 : i32, i32
  }
  func.func @transform_3(%arg0: i32, %arg1: i32) -> (i32, i32) {
    %c0_i32 = arith.constant 0 : i32
    %c0_i32_0 = arith.constant 0 : i32
    %c0_i32_1 = arith.constant 0 : i32
    return %c0_i32, %c0_i32_0 : i32, i32
  }
  func.func @transform_4(%arg0: i32, %arg1: i32) -> (i32, i32) {
    %c0_i32 = arith.constant 0 : i32
    %c0_i32_0 = arith.constant 0 : i32
    %c0_i32_1 = arith.constant 0 : i32
    return %c0_i32, %c0_i32_0 : i32, i32
  }
  func.func @transform_5(%arg0: i32, %arg1: i32) -> (i32, i32, i32) {
    %c0_i32 = arith.constant 0 : i32
    %c0_i32_0 = arith.constant 0 : i32
    return %arg0, %c0_i32, %arg1 : i32, i32, i32
  }
}

</mosaic_0001>

<llo_original>
// kernel: tpu_custom_call.1
$region0: #{tpu_custom_call.1}
  #allocation0 [shape = 'u32[]', space=smem, size = 0x4, offset = 0x4, fixed_abs, tag = 'smem constant byte address 0x4 - core index']
  #allocation1 [shape = 'u32[72,128]{1,0:T(1,128)}', space=vmem, size = 0x9000, scoped, tag = 'internal scratch']
  %s0 = inlined_call_operand.hbm [shape: f32[2,128,128], index: 0, kind: input, shape index: {}, may-alias: {0,5}]
  %s1 = inlined_call_operand.vmem [shape: bf16[128,128], index: 1, kind: input, shape index: {}]
  %s2 = inlined_call_operand.vmem [shape: f32[128,1], index: 2, kind: input, shape index: {}]
  %s3 = inlined_call_operand.vmem [shape: bf16[128,128], index: 3, kind: input, shape index: {}]
  %s4 = inlined_call_operand.vmem [shape: f32[128,1], index: 4, kind: input, shape index: {}]
  %s5 = inlined_call_operand.hbm [shape: f32[2,128,128], index: 5, kind: output, shape index: {}, may-alias: {0,5}]
  %s6 = sld [smem:[#allocation0]]
  $region57: #{tpu_custom_call.1} parent=0
    _
  %s8 = ssub.s32 1, %s6
  %s9 = scalar_select 0, %s8, %s6
  $region1: #{tpu_custom_call.1} parent=0
    #allocation2 [shape = 'u8[131072]{0}', space=vmem, size = 0x20000, scoped, tag = 'input window, operand 0']
    #allocation3 [shape = 's32[2]{0}', space=sflag, size = 0x8, scoped, tag = 'scoped memory for tpu_custom_call.1']
    #allocation4 [shape = 's32[2]{0}', space=sflag, size = 0x8, scoped, tag = 'scoped memory for tpu_custom_call.1']
    #allocation5 [shape = 'u8[131072]{0}', space=vmem, size = 0x20000, scoped, tag = 'output window, operand 0']
    %10 = vsyncpa [#allocation3], 0
    %s11 = scalar_lea.sflag [#allocation3], 1
    %12 = vsyncpa %s11, 0
    %13 = vsyncpa [#allocation4], 0
    %s14 = scalar_lea.sflag [#allocation4], 1
    %15 = vsyncpa %s14, 0
    loop: start=0, step=1, limit=4
    $region2: #{tpu_custom_call.1} parent=1 // loop_pre_header
      _
    $region3: #{tpu_custom_call.1} parent=1 // loop_header
      %s17 = sphi 0, %s21
      %p18 = scmp.ge.s32.totalorder %s17, 4
      %s24 = sphi 0, %s36
      %s25 = sphi 0, %s32
      %s26 = sphi 0, %s24
      %s27 = sphi 0, %s25
      %s28 = sphi 0, %s26
      %s29 = sphi 0, %s27
      %s41 = sphi 0, %s43
      %s44 = sphi 0, %s41
      %s45 = sphi 0, %s44
      %s61 = sphi 0, %s45
      %s65 = sphi 0, %s65
      %s67 = sphi 0, %s65
      %s68 = sphi 0, %s67
      %s82 = sphi 0, %s68
      %s86 = sphi 0, %s86
      %s88 = sphi 0, %s86
      %s89 = sphi 0, %s88
      %s103 = sphi 0, %s89
      %s107 = sphi 0, %s107
      %s109 = sphi 0, %s107
      %s110 = sphi 0, %s109
      %s124 = sphi 0, %s110
      %s128 = sphi 0, %s128
      %s130 = sphi 0, %s128
      %s131 = sphi 0, %s130
      %s145 = sphi 0, %s131
      %s153 = sphi 0, %s155
      %s156 = sphi 0, %s153
      %s157 = sphi 0, %s156
      %s173 = sphi 0, %s157
    $region4: #{tpu_custom_call.1} parent=1 // loop_header_branch
      %20 = sbr.rel (%p18) target = $region8
    $region5: #{tpu_custom_call.1} parent=1 // loop_body
      %s22 = ssub.s32 %s17, 1
      %s23 = ssub.s32 %s17, 2
      %s30 = sadd.s32 1, %s25
      %p31 = scmp.ge.s32.totalorder %s30, 1
      %s32 = scalar_select %p31, 0, %s30
      %s33 = sadd.s32 1, %s24
      %s34 = scalar_select %p31, %s33, %s24
      %p35 = scmp.ge.s32.totalorder %s34, 2
      %s36 = scalar_select %p35, 0, %s34
      %s37 = ssub.s32 %s24, %s36
      %s38 = ssub.s32 %s25, %s32
      %s39 = sor.u32 %s37, %s38
      %p40 = scmp.eq.s32.totalorder %s39, 0
      %s42 = sadd.s32 %s41, 1
      %s43 = scalar_select %p40, %s41, %s42
      %p46 = pneg %p40
      %p47 = scmp.eq.s32.totalorder %s17, 1
      %p48 = por %p46, %p47
      %p49 = scmp.ne.s32.totalorder %s41, %s44
      %p50 = scmp.eq.s32.totalorder %s17, 0
      %p51 = por %p49, %p50
      %p52 = scmp.ne.s32.totalorder %s41, %s44
      %p53 = scmp.eq.s32.totalorder %s22, 1
      %p54 = por %p52, %p53
      %p55 = scmp.ne.s32.totalorder %s44, %s45
      %p56 = scmp.eq.s32.totalorder %s22, 0
      %p57 = por %p55, %p56
      %p58 = scmp.ne.s32.totalorder %s44, %s45
      %p59 = scmp.eq.s32.totalorder %s23, 1
      %p60 = por %p58, %p59
      %p62 = scmp.ne.s32.totalorder %s45, %s61
      %p63 = scmp.eq.s32.totalorder %s23, 0
      %p64 = por %p62, %p63
      %s66 = sadd.s32 %s65, 1
      %p69 = scmp.eq.s32.totalorder %s17, 1
      %p70 = scmp.ne.s32.totalorder %s65, %s67
      %p71 = scmp.eq.s32.totalorder %s17, 0
      %p72 = por %p70, %p71
      %p73 = scmp.ne.s32.totalorder %s65, %s67
      %p74 = scmp.eq.s32.totalorder %s22, 1
      %p75 = por %p73, %p74
      %p76 = scmp.ne.s32.totalorder %s67, %s68
      %p77 = scmp.eq.s32.totalorder %s22, 0
      %p78 = por %p76, %p77
      %p79 = scmp.ne.s32.totalorder %s67, %s68
      %p80 = scmp.eq.s32.totalorder %s23, 1
      %p81 = por %p79, %p80
      %p83 = scmp.ne.s32.totalorder %s68, %s82
      %p84 = scmp.eq.s32.totalorder %s23, 0
      %p85 = por %p83, %p84
      %s87 = sadd.s32 %s86, 1
      %p90 = scmp.eq.s32.totalorder %s17, 1
      %p91 = scmp.ne.s32.totalorder %s86, %s88
      %p92 = scmp.eq.s32.totalorder %s17, 0
      %p93 = por %p91, %p92
      %p94 = scmp.ne.s32.totalorder %s86, %s88
      %p95 = scmp.eq.s32.totalorder %s22, 1
      %p96 = por %p94, %p95
      %p97 = scmp.ne.s32.totalorder %s88, %s89
      %p98 = scmp.eq.s32.totalorder %s22, 0
      %p99 = por %p97, %p98
      %p100 = scmp.ne.s32.totalorder %s88, %s89
      %p101 = scmp.eq.s32.totalorder %s23, 1
      %p102 = por %p100, %p101
      %p104 = scmp.ne.s32.totalorder %s89, %s103
      %p105 = scmp.eq.s32.totalorder %s23, 0
      %p106 = por %p104, %p105
      %s108 = sadd.s32 %s107, 1
      %p111 = scmp.eq.s32.totalorder %s17, 1
      %p112 = scmp.ne.s32.totalorder %s107, %s109
      %p113 = scmp.eq.s32.totalorder %s17, 0
      %p114 = por %p112, %p113
      %p115 = scmp.ne.s32.totalorder %s107, %s109
      %p116 = scmp.eq.s32.totalorder %s22, 1
      %p117 = por %p115, %p116
      %p118 = scmp.ne.s32.totalorder %s109, %s110
      %p119 = scmp.eq.s32.totalorder %s22, 0
      %p120 = por %p118, %p119
      %p121 = scmp.ne.s32.totalorder %s109, %s110
      %p122 = scmp.eq.s32.totalorder %s23, 1
      %p123 = por %p121, %p122
      %p125 = scmp.ne.s32.totalorder %s110, %s124
      %p126 = scmp.eq.s32.totalorder %s23, 0
      %p127 = por %p125, %p126
      %s129 = sadd.s32 %s128, 1
      %p132 = scmp.eq.s32.totalorder %s17, 1
      %p133 = scmp.ne.s32.totalorder %s128, %s130
      %p134 = scmp.eq.s32.totalorder %s17, 0
      %p135 = por %p133, %p134
      %p136 = scmp.ne.s32.totalorder %s128, %s130
      %p137 = scmp.eq.s32.totalorder %s22, 1
      %p138 = por %p136, %p137
      %p139 = scmp.ne.s32.totalorder %s130, %s131
      %p140 = scmp.eq.s32.totalorder %s22, 0
      %p141 = por %p139, %p140
      %p142 = scmp.ne.s32.totalorder %s130, %s131
      %p143 = scmp.eq.s32.totalorder %s23, 1
      %p144 = por %p142, %p143
      %p146 = scmp.ne.s32.totalorder %s131, %s145
      %p147 = scmp.eq.s32.totalorder %s23, 0
      %p148 = por %p146, %p147
      %s149 = ssub.s32 %s24, %s36
      %s150 = ssub.s32 %s25, %s32
      %s151 = sor.u32 %s149, %s150
      %p152 = scmp.eq.s32.totalorder %s151, 0
      %s154 = sadd.s32 %s153, 1
      %s155 = scalar_select %p152, %s153, %s154
      %p158 = pneg %p152
      %p159 = scmp.eq.s32.totalorder %s17, 1
      %p160 = por %p158, %p159
      %p161 = scmp.ne.s32.totalorder %s153, %s156
      %p162 = scmp.eq.s32.totalorder %s17, 0
      %p163 = por %p161, %p162
      %p164 = scmp.ne.s32.totalorder %s153, %s156
      %p165 = scmp.eq.s32.totalorder %s22, 1
      %p166 = por %p164, %p165
      %p167 = scmp.ne.s32.totalorder %s156, %s157
      %p168 = scmp.eq.s32.totalorder %s22, 0
      %p169 = por %p167, %p168
      %p170 = scmp.ne.s32.totalorder %s156, %s157
      %p171 = scmp.eq.s32.totalorder %s23, 1
      %p172 = por %p170, %p171
      %p174 = scmp.ne.s32.totalorder %s157, %s173
      %p175 = scmp.eq.s32.totalorder %s23, 0
      %p176 = por %p174, %p175
      %p177 = scmp.le.s32.totalorder 1, %s17
      %p178 = scmp.lt.s32.totalorder %s17, 3
      %p179 = pnand %p177, %p178
      %p180 = pneg %p179
      // Predicated region
      $region9: #{tpu_custom_call.1} parent=5 // pred_check
        _
      $region10: #{tpu_custom_call.1} parent=5 // pred_check_branch
        %182 = sbr.rel (%p179) target = $region12
      $region11: #{tpu_custom_call.1} parent=5 // pred_region
        %s183 = ssub.s32 %s17, 1
        // Predicated region
        $region13: #{tpu_custom_call.1} parent=11 // pred_check
          %p184 = pneg %p78
        $region14: #{tpu_custom_call.1} parent=11 // pred_check_branch
          %186 = sbr.rel (%p184) target = $region16
        $region15: #{tpu_custom_call.1} parent=11 // pred_region
          _
        $region16: #{tpu_custom_call.1} parent=11 // pred_fallthru
          _
        // Predicated region
        $region17: #{tpu_custom_call.1} parent=11 // pred_check
          %p187 = pneg %p99
        $region18: #{tpu_custom_call.1} parent=11 // pred_check_branch
          %189 = sbr.rel (%p187) target = $region20
        $region19: #{tpu_custom_call.1} parent=11 // pred_region
          _
        $region20: #{tpu_custom_call.1} parent=11 // pred_fallthru
          _
        // Predicated region
        $region21: #{tpu_custom_call.1} parent=11 // pred_check
          %p190 = pneg %p120
        $region22: #{tpu_custom_call.1} parent=11 // pred_check_branch
          %192 = sbr.rel (%p190) target = $region24
        $region23: #{tpu_custom_call.1} parent=11 // pred_region
          _
        $region24: #{tpu_custom_call.1} parent=11 // pred_fallthru
          _
        // Predicated region
        $region25: #{tpu_custom_call.1} parent=11 // pred_check
          %p193 = pneg %p141
        $region26: #{tpu_custom_call.1} parent=11 // pred_check_branch
          %195 = sbr.rel (%p193) target = $region28
        $region27: #{tpu_custom_call.1} parent=11 // pred_region
          _
        $region28: #{tpu_custom_call.1} parent=11 // pred_fallthru
          _
      $region12: #{tpu_custom_call.1} parent=5 // pred_fallthru
        _
      %p196 = scmp.lt.s32.totalorder %s17, 2
      // Predicated region
      $region29: #{tpu_custom_call.1} parent=5 // pred_check
        %p197 = pneg %p196
      $region30: #{tpu_custom_call.1} parent=5 // pred_check_branch
        %199 = sbr.rel (%p197) target = $region32
      $region31: #{tpu_custom_call.1} parent=5 // pred_region
        // Predicated region
        $region33: #{tpu_custom_call.1} parent=31 // pred_check
          %p200 = pneg %p51
        $region34: #{tpu_custom_call.1} parent=31 // pred_check_branch
          %202 = sbr.rel (%p200) target = $region36
        $region35: #{tpu_custom_call.1} parent=31 // pred_region
          %s203 = sand.u32 %s41, 1
          %s204 = scalar_lea.sflag [#allocation3], %s203
          %s205 = sand.u32 %s41, 1
          %s206 = smul.addr %s205, 128
          %s207 = scalar_lea.vmem [#allocation2], %s206
          %209 = vsyncadd %s204, 0
          %s210 = smul.addr %s24, 16
          %s211 = sadd.s32 %s25, %s210
          %s212 = smul.addr %s211, 8
          %s213 = scalar_lea.hbm %s0, %s212
          %s214 = sshll.u32 %s213, 4
          %s215 = int_to_ptr.hbm [resolvable:$true] %s214
          %s216 = sshll.u32 %s207, 4
          %s217 = int_to_ptr.vmem [resolvable:$true] %s216
          %222 = dma.hbm_to_vmem [thread:$0]  %s215, 2048, %s217, %s204, 128, 128, 8
        $region36: #{tpu_custom_call.1} parent=31 // pred_fallthru
          _
      $region32: #{tpu_custom_call.1} parent=5 // pred_fallthru
        _
      %p223 = scmp.le.s32.totalorder 1, %s17
      %p224 = scmp.lt.s32.totalorder %s17, 3
      %p225 = pnand %p223, %p224
      %p226 = pneg %p225
      // Predicated region
      $region37: #{tpu_custom_call.1} parent=5 // pred_check
        _
      $region38: #{tpu_custom_call.1} parent=5 // pred_check_branch
        %228 = sbr.rel (%p225) target = $region40
      $region39: #{tpu_custom_call.1} parent=5 // pred_region
        %s229 = ssub.s32 %s17, 1
        %s230 = sand.u32 %s44, 1
        %s231 = scalar_lea.sflag [#allocation3], %s230
        %s232 = sand.u32 %s44, 1
        %s233 = smul.addr %s232, 128
        %s234 = scalar_lea.vmem [#allocation2], %s233
        // Predicated region
        $region41: #{tpu_custom_call.1} parent=39 // pred_check
          %p235 = pneg %p57
        $region42: #{tpu_custom_call.1} parent=39 // pred_check_branch
          %237 = sbr.rel (%p235) target = $region44
        $region43: #{tpu_custom_call.1} parent=39 // pred_region
          %239 = dma.done %s231, 2048
        $region44: #{tpu_custom_call.1} parent=39 // pred_fallthru
          _
        %s240 = sand.u32 %s44, 1
        %s241 = scalar_lea.sflag [#allocation3], %s240
        %s242 = sand.u32 %s44, 1
        %s243 = smul.addr %s242, 128
        %s244 = scalar_lea.vmem [#allocation2], %s243
        %p245 = pneg %p57
        %p246 = pneg %p54
        %p247 = pneg %p78
        %p248 = pneg %p75
        %p249 = pneg %p99
        %p250 = pneg %p96
        %p251 = pneg %p120
        %p252 = pneg %p117
        %p253 = pneg %p141
        %p254 = pneg %p138
        %p255 = pneg %p169
        %p256 = pneg %p166
        %s257 = sand.u32 %s156, 1
        %s258 = scalar_lea.sflag [#allocation4], %s257
        %s259 = sand.u32 %s156, 1
        %s260 = smul.addr %s259, 128
        %s261 = scalar_lea.vmem [#allocation5], %s260
        %v262 = vld [vmem:[%s234] sm:$0xff]
        %v263 = vld [vmem:[%s234 + $0x8] sm:$0xff]
        %v264 = vld [vmem:[%s234 + $0x10] sm:$0xff]
        %v265 = vld [vmem:[%s234 + $0x18] sm:$0xff]
        %v266 = vld [vmem:[%s234 + $0x20] sm:$0xff]
        %v267 = vld [vmem:[%s234 + $0x28] sm:$0xff]
        %v268 = vld [vmem:[%s234 + $0x30] sm:$0xff]
        %v269 = vld [vmem:[%s234 + $0x38] sm:$0xff]
        %v270 = vld [vmem:[%s234 + $0x40] sm:$0xff]
        %v271 = vld [vmem:[%s234 + $0x48] sm:$0xff]
        %v272 = vld [vmem:[%s234 + $0x50] sm:$0xff]
        %v273 = vld [vmem:[%s234 + $0x58] sm:$0xff]
        %v274 = vld [vmem:[%s234 + $0x60] sm:$0xff]
        %v275 = vld [vmem:[%s234 + $0x68] sm:$0xff]
        %v276 = vld [vmem:[%s234 + $0x70] sm:$0xff]
        %v277 = vld [vmem:[%s234 + $0x78] sm:$0xff]
        %v278 = vpack.c.bf16 %v263, %v262
        %v279 = vpack.c.bf16 %v265, %v264
        %v280 = vpack.c.bf16 %v267, %v266
        %v281 = vpack.c.bf16 %v269, %v268
        %v282 = vpack.c.bf16 %v271, %v270
        %v283 = vpack.c.bf16 %v273, %v272
        %v284 = vpack.c.bf16 %v275, %v274
        %v285 = vpack.c.bf16 %v277, %v276
        %v286 = vld [vmem:[%s1] sm:$0xf]
        %v287 = vld [vmem:[%s1 + $0x4] sm:$0xf]
        %v288 = vld [vmem:[%s1 + $0x8] sm:$0xf]
        %v289 = vld [vmem:[%s1 + $0xc] sm:$0xf]
        %v290 = vld [vmem:[%s1 + $0x10] sm:$0xf]
        %v291 = vld [vmem:[%s1 + $0x14] sm:$0xf]
        %v292 = vld [vmem:[%s1 + $0x18] sm:$0xf]
        %v293 = vld [vmem:[%s1 + $0x1c] sm:$0xf]
        %v294 = vld [vmem:[%s1 + $0x20] sm:$0xf]
        %v295 = vld [vmem:[%s1 + $0x24] sm:$0xf]
        %v296 = vld [vmem:[%s1 + $0x28] sm:$0xf]
        %v297 = vld [vmem:[%s1 + $0x2c] sm:$0xf]
        %v298 = vld [vmem:[%s1 + $0x30] sm:$0xf]
        %v299 = vld [vmem:[%s1 + $0x34] sm:$0xf]
        %v300 = vld [vmem:[%s1 + $0x38] sm:$0xf]
        %v301 = vld [vmem:[%s1 + $0x3c] sm:$0xf]
        %v302 = vld [vmem:[%s2] sm:$0xff]
        %v303 = vld [vmem:[%s2 + $0x8] sm:$0xff]
        %v304 = vld [vmem:[%s2 + $0x10] sm:$0xff]
        %v305 = vld [vmem:[%s2 + $0x18] sm:$0xff]
        %v306 = vld [vmem:[%s2 + $0x20] sm:$0xff]
        %v307 = vld [vmem:[%s2 + $0x28] sm:$0xff]
        %v308 = vld [vmem:[%s2 + $0x30] sm:$0xff]
        %v309 = vld [vmem:[%s2 + $0x38] sm:$0xff]
        %v310 = vld [vmem:[%s2 + $0x40] sm:$0xff]
        %v311 = vld [vmem:[%s2 + $0x48] sm:$0xff]
        %v312 = vld [vmem:[%s2 + $0x50] sm:$0xff]
        %v313 = vld [vmem:[%s2 + $0x58] sm:$0xff]
        %v314 = vld [vmem:[%s2 + $0x60] sm:$0xff]
        %v315 = vld [vmem:[%s2 + $0x68] sm:$0xff]
        %v316 = vld [vmem:[%s2 + $0x70] sm:$0xff]
        %v317 = vld [vmem:[%s2 + $0x78] sm:$0xff]
        %319 = vset.pattern.permute.xlu0 0
        %320 = vperm.xlu0 %319, %v302
        %v321 = vpop.permute.xlu0 %320
        %324 = vset.pattern.permute.xlu0 0
        %325 = vperm.xlu0 %324, %v303
        %v326 = vpop.permute.xlu0 %325
        %329 = vset.pattern.permute.xlu0 0
        %330 = vperm.xlu0 %329, %v304
        %v331 = vpop.permute.xlu0 %330
        %334 = vset.pattern.permute.xlu0 0
        %335 = vperm.xlu0 %334, %v305
        %v336 = vpop.permute.xlu0 %335
        %339 = vset.pattern.permute.xlu0 0
        %340 = vperm.xlu0 %339, %v306
        %v341 = vpop.permute.xlu0 %340
        %344 = vset.pattern.permute.xlu0 0
        %345 = vperm.xlu0 %344, %v307
        %v346 = vpop.permute.xlu0 %345
        %349 = vset.pattern.permute.xlu0 0
        %350 = vperm.xlu0 %349, %v308
        %v351 = vpop.permute.xlu0 %350
        %354 = vset.pattern.permute.xlu0 0
        %355 = vperm.xlu0 %354, %v309
        %v356 = vpop.permute.xlu0 %355
        %359 = vset.pattern.permute.xlu0 0
        %360 = vperm.xlu0 %359, %v310
        %v361 = vpop.permute.xlu0 %360
        %364 = vset.pattern.permute.xlu0 0
        %365 = vperm.xlu0 %364, %v311
        %v366 = vpop.permute.xlu0 %365
        %369 = vset.pattern.permute.xlu0 0
        %370 = vperm.xlu0 %369, %v312
        %v371 = vpop.permute.xlu0 %370
        %374 = vset.pattern.permute.xlu0 0
        %375 = vperm.xlu0 %374, %v313
        %v376 = vpop.permute.xlu0 %375
        %379 = vset.pattern.permute.xlu0 0
        %380 = vperm.xlu0 %379, %v314
        %v381 = vpop.permute.xlu0 %380
        %384 = vset.pattern.permute.xlu0 0
        %385 = vperm.xlu0 %384, %v315
        %v386 = vpop.permute.xlu0 %385
        %389 = vset.pattern.permute.xlu0 0
        %390 = vperm.xlu0 %389, %v316
        %v391 = vpop.permute.xlu0 %390
        %394 = vset.pattern.permute.xlu0 0
        %395 = vperm.xlu0 %394, %v317
        %v396 = vpop.permute.xlu0 %395
        %v414 = vunpack.c.l.b16 %v286
        %v415 = vunpack.c.l.b16 %v287
        %v416 = vunpack.c.l.b16 %v288
        %v417 = vunpack.c.l.b16 %v289
        %v418 = vunpack.c.l.b16 %v290
        %v419 = vunpack.c.l.b16 %v291
        %v420 = vunpack.c.l.b16 %v292
        %v421 = vunpack.c.l.b16 %v293
        %v422 = vunpack.c.l.b16 %v294
        %v423 = vunpack.c.l.b16 %v295
        %v424 = vunpack.c.l.b16 %v296
        %v425 = vunpack.c.l.b16 %v297
        %v426 = vunpack.c.l.b16 %v298
        %v427 = vunpack.c.l.b16 %v299
        %v428 = vunpack.c.l.b16 %v300
        %v429 = vunpack.c.l.b16 %v301
        %v430 = vpack.c.b16 %v415, %v414
        %v431 = vpack.c.b16 %v417, %v416
        %v432 = vpack.c.b16 %v419, %v418
        %v433 = vpack.c.b16 %v421, %v420
        %v434 = vpack.c.b16 %v423, %v422
        %v435 = vpack.c.b16 %v425, %v424
        %v436 = vpack.c.b16 %v427, %v426
        %v437 = vpack.c.b16 %v429, %v428
        %446 = vmatpush.bf16.msra.mxu0 %v285
        %447 = vmatpush.bf16.msra.mxu0 %v284
        %448 = vmatpush.bf16.msra.mxu0 %v283
        %449 = vmatpush.bf16.msra.mxu0 %v282
        %450 = vmatpush.bf16.msra.mxu0 %v281
        %451 = vmatpush.bf16.msra.mxu0 %v280
        %452 = vmatpush.bf16.msra.mxu0 %v279
        %453 = vmatpush.bf16.msra.mxu0 %v278
        %454 = vmatmul.bf16.gmra.mxu0 %v430
        %v455 = vpop.f32.mrf.mxu0
        %v456 = vadd.f32 %v321, %v455
        %v457 = vpop.f32.mrf.mxu0
        %v458 = vadd.f32 %v326, %v457
        %459 = vmatmul.bf16.gmra.mxu0 %v431
        %v460 = vpop.f32.mrf.mxu0
        %v461 = vadd.f32 %v331, %v460
        %v462 = vpop.f32.mrf.mxu0
        %v463 = vadd.f32 %v336, %v462
        %464 = vmatmul.bf16.gmra.mxu0 %v432
        %v465 = vpop.f32.mrf.mxu0
        %v466 = vadd.f32 %v341, %v465
        %v467 = vpop.f32.mrf.mxu0
        %v468 = vadd.f32 %v346, %v467
        %469 = vmatmul.bf16.gmra.mxu0 %v433
        %v470 = vpop.f32.mrf.mxu0
        %v471 = vadd.f32 %v351, %v470
        %v472 = vpop.f32.mrf.mxu0
        %v473 = vadd.f32 %v356, %v472
        %474 = vmatmul.bf16.gmra.mxu0 %v434
        %v475 = vpop.f32.mrf.mxu0
        %v476 = vadd.f32 %v361, %v475
        %v477 = vpop.f32.mrf.mxu0
        %v478 = vadd.f32 %v366, %v477
        %479 = vmatmul.bf16.gmra.mxu0 %v435
        %v480 = vpop.f32.mrf.mxu0
        %v481 = vadd.f32 %v371, %v480
        %v482 = vpop.f32.mrf.mxu0
        %v483 = vadd.f32 %v376, %v482
        %484 = vmatmul.bf16.gmra.mxu0 %v436
        %v485 = vpop.f32.mrf.mxu0
        %v486 = vadd.f32 %v381, %v485
        %v487 = vpop.f32.mrf.mxu0
        %v488 = vadd.f32 %v386, %v487
        %489 = vmatmul.bf16.gmra.mxu0 %v437
        %v490 = vpop.f32.mrf.mxu0
        %v491 = vadd.f32 %v391, %v490
        %v492 = vpop.f32.mrf.mxu0
        %v493 = vadd.f32 %v396, %v492
        %494 = vdwg.mxu0
        %v495 = vmax.f32 %v456, 0.0
        %v496 = vmax.f32 %v458, 0.0
        %v497 = vmax.f32 %v461, 0.0
        %v498 = vmax.f32 %v463, 0.0
        %v499 = vmax.f32 %v466, 0.0
        %v500 = vmax.f32 %v468, 0.0
        %v501 = vmax.f32 %v471, 0.0
        %v502 = vmax.f32 %v473, 0.0
        %v503 = vmax.f32 %v476, 0.0
        %v504 = vmax.f32 %v478, 0.0
        %v505 = vmax.f32 %v481, 0.0
        %v506 = vmax.f32 %v483, 0.0
        %v507 = vmax.f32 %v486, 0.0
        %v508 = vmax.f32 %v488, 0.0
        %v509 = vmax.f32 %v491, 0.0
        %v510 = vmax.f32 %v493, 0.0
        %v511 = vld [vmem:[%s3] sm:$0xf]
        %v512 = vld [vmem:[%s3 + $0x4] sm:$0xf]
        %v513 = vld [vmem:[%s3 + $0x8] sm:$0xf]
        %v514 = vld [vmem:[%s3 + $0xc] sm:$0xf]
        %v515 = vld [vmem:[%s3 + $0x10] sm:$0xf]
        %v516 = vld [vmem:[%s3 + $0x14] sm:$0xf]
        %v517 = vld [vmem:[%s3 + $0x18] sm:$0xf]
        %v518 = vld [vmem:[%s3 + $0x1c] sm:$0xf]
        %v519 = vld [vmem:[%s3 + $0x20] sm:$0xf]
        %v520 = vld [vmem:[%s3 + $0x24] sm:$0xf]
        %v521 = vld [vmem:[%s3 + $0x28] sm:$0xf]
        %v522 = vld [vmem:[%s3 + $0x2c] sm:$0xf]
        %v523 = vld [vmem:[%s3 + $0x30] sm:$0xf]
        %v524 = vld [vmem:[%s3 + $0x34] sm:$0xf]
        %v525 = vld [vmem:[%s3 + $0x38] sm:$0xf]
        %v526 = vld [vmem:[%s3 + $0x3c] sm:$0xf]
        %v527 = vpack.c.bf16 %v496, %v495
        %v528 = vpack.c.bf16 %v498, %v497
        %v529 = vpack.c.bf16 %v500, %v499
        %v530 = vpack.c.bf16 %v502, %v501
        %v531 = vpack.c.bf16 %v504, %v503
        %v532 = vpack.c.bf16 %v506, %v505
        %v533 = vpack.c.bf16 %v508, %v507
        %v534 = vpack.c.bf16 %v510, %v509
        %v535 = vld [vmem:[%s4] sm:$0xff]
        %v536 = vld [vmem:[%s4 + $0x8] sm:$0xff]
        %v537 = vld [vmem:[%s4 + $0x10] sm:$0xff]
        %v538 = vld [vmem:[%s4 + $0x18] sm:$0xff]
        %v539 = vld [vmem:[%s4 + $0x20] sm:$0xff]
        %v540 = vld [vmem:[%s4 + $0x28] sm:$0xff]
        %v541 = vld [vmem:[%s4 + $0x30] sm:$0xff]
        %v542 = vld [vmem:[%s4 + $0x38] sm:$0xff]
        %v543 = vld [vmem:[%s4 + $0x40] sm:$0xff]
        %v544 = vld [vmem:[%s4 + $0x48] sm:$0xff]
        %v545 = vld [vmem:[%s4 + $0x50] sm:$0xff]
        %v546 = vld [vmem:[%s4 + $0x58] sm:$0xff]
        %v547 = vld [vmem:[%s4 + $0x60] sm:$0xff]
        %v548 = vld [vmem:[%s4 + $0x68] sm:$0xff]
        %v549 = vld [vmem:[%s4 + $0x70] sm:$0xff]
        %v550 = vld [vmem:[%s4 + $0x78] sm:$0xff]
        %552 = vset.pattern.permute.xlu0 0
        %553 = vperm.xlu0 %552, %v535
        %v554 = vpop.permute.xlu0 %553
        %557 = vset.pattern.permute.xlu0 0
        %558 = vperm.xlu0 %557, %v536
        %v559 = vpop.permute.xlu0 %558
        %562 = vset.pattern.permute.xlu0 0
        %563 = vperm.xlu0 %562, %v537
        %v564 = vpop.permute.xlu0 %563
        %567 = vset.pattern.permute.xlu0 0
        %568 = vperm.xlu0 %567, %v538
        %v569 = vpop.permute.xlu0 %568
        %572 = vset.pattern.permute.xlu0 0
        %573 = vperm.xlu0 %572, %v539
        %v574 = vpop.permute.xlu0 %573
        %577 = vset.pattern.permute.xlu0 0
        %578 = vperm.xlu0 %577, %v540
        %v579 = vpop.permute.xlu0 %578
        %582 = vset.pattern.permute.xlu0 0
        %583 = vperm.xlu0 %582, %v541
        %v584 = vpop.permute.xlu0 %583
        %587 = vset.pattern.permute.xlu0 0
        %588 = vperm.xlu0 %587, %v542
        %v589 = vpop.permute.xlu0 %588
        %592 = vset.pattern.permute.xlu0 0
        %593 = vperm.xlu0 %592, %v543
        %v594 = vpop.permute.xlu0 %593
        %597 = vset.pattern.permute.xlu0 0
        %598 = vperm.xlu0 %597, %v544
        %v599 = vpop.permute.xlu0 %598
        %602 = vset.pattern.permute.xlu0 0
        %603 = vperm.xlu0 %602, %v545
        %v604 = vpop.permute.xlu0 %603
        %607 = vset.pattern.permute.xlu0 0
        %608 = vperm.xlu0 %607, %v546
        %v609 = vpop.permute.xlu0 %608
        %612 = vset.pattern.permute.xlu0 0
        %613 = vperm.xlu0 %612, %v547
        %v614 = vpop.permute.xlu0 %613
        %617 = vset.pattern.permute.xlu0 0
        %618 = vperm.xlu0 %617, %v548
        %v619 = vpop.permute.xlu0 %618
        %622 = vset.pattern.permute.xlu0 0
        %623 = vperm.xlu0 %622, %v549
        %v624 = vpop.permute.xlu0 %623
        %627 = vset.pattern.permute.xlu0 0
        %628 = vperm.xlu0 %627, %v550
        %v629 = vpop.permute.xlu0 %628
        %v647 = vunpack.c.l.b16 %v511
        %v648 = vunpack.c.l.b16 %v512
        %v649 = vunpack.c.l.b16 %v513
        %v650 = vunpack.c.l.b16 %v514
        %v651 = vunpack.c.l.b16 %v515
        %v652 = vunpack.c.l.b16 %v516
        %v653 = vunpack.c.l.b16 %v517
        %v654 = vunpack.c.l.b16 %v518
        %v655 = vunpack.c.l.b16 %v519
        %v656 = vunpack.c.l.b16 %v520
        %v657 = vunpack.c.l.b16 %v521
        %v658 = vunpack.c.l.b16 %v522
        %v659 = vunpack.c.l.b16 %v523
        %v660 = vunpack.c.l.b16 %v524
        %v661 = vunpack.c.l.b16 %v525
        %v662 = vunpack.c.l.b16 %v526
        %v663 = vpack.c.b16 %v648, %v647
        %v664 = vpack.c.b16 %v650, %v649
        %v665 = vpack.c.b16 %v652, %v651
        %v666 = vpack.c.b16 %v654, %v653
        %v667 = vpack.c.b16 %v656, %v655
        %v668 = vpack.c.b16 %v658, %v657
        %v669 = vpack.c.b16 %v660, %v659
        %v670 = vpack.c.b16 %v662, %v661
        %679 = vmatpush.bf16.msra.mxu0 %v534
        %680 = vmatpush.bf16.msra.mxu0 %v533
        %681 = vmatpush.bf16.msra.mxu0 %v532
        %682 = vmatpush.bf16.msra.mxu0 %v531
        %683 = vmatpush.bf16.msra.mxu0 %v530
        %684 = vmatpush.bf16.msra.mxu0 %v529
        %685 = vmatpush.bf16.msra.mxu0 %v528
        %686 = vmatpush.bf16.msra.mxu0 %v527
        %687 = vmatmul.bf16.gmra.mxu0 %v663
        %v688 = vpop.f32.mrf.mxu0
        %v689 = vadd.f32 %v554, %v688
        %v690 = vpop.f32.mrf.mxu0
        %v691 = vadd.f32 %v559, %v690
        %692 = vmatmul.bf16.gmra.mxu0 %v664
        %v693 = vpop.f32.mrf.mxu0
        %v694 = vadd.f32 %v564, %v693
        %v695 = vpop.f32.mrf.mxu0
        %v696 = vadd.f32 %v569, %v695
        %697 = vmatmul.bf16.gmra.mxu0 %v665
        %v698 = vpop.f32.mrf.mxu0
        %v699 = vadd.f32 %v574, %v698
        %v700 = vpop.f32.mrf.mxu0
        %v701 = vadd.f32 %v579, %v700
        %702 = vmatmul.bf16.gmra.mxu0 %v666
        %v703 = vpop.f32.mrf.mxu0
        %v704 = vadd.f32 %v584, %v703
        %v705 = vpop.f32.mrf.mxu0
        %v706 = vadd.f32 %v589, %v705
        %707 = vmatmul.bf16.gmra.mxu0 %v667
        %v708 = vpop.f32.mrf.mxu0
        %v709 = vadd.f32 %v594, %v708
        %v710 = vpop.f32.mrf.mxu0
        %v711 = vadd.f32 %v599, %v710
        %712 = vmatmul.bf16.gmra.mxu0 %v668
        %v713 = vpop.f32.mrf.mxu0
        %v714 = vadd.f32 %v604, %v713
        %v715 = vpop.f32.mrf.mxu0
        %v716 = vadd.f32 %v609, %v715
        %717 = vmatmul.bf16.gmra.mxu0 %v669
        %v718 = vpop.f32.mrf.mxu0
        %v719 = vadd.f32 %v614, %v718
        %v720 = vpop.f32.mrf.mxu0
        %v721 = vadd.f32 %v619, %v720
        %722 = vmatmul.bf16.gmra.mxu0 %v670
        %v723 = vpop.f32.mrf.mxu0
        %v724 = vadd.f32 %v624, %v723
        %v725 = vpop.f32.mrf.mxu0
        %v726 = vadd.f32 %v629, %v725
        %727 = vdwg.mxu0
        %v728 = vadd.f32 %v262, %v689
        %v729 = vadd.f32 %v263, %v691
        %v730 = vadd.f32 %v264, %v694
        %v731 = vadd.f32 %v265, %v696
        %v732 = vadd.f32 %v266, %v699
        %v733 = vadd.f32 %v267, %v701
        %v734 = vadd.f32 %v268, %v704
        %v735 = vadd.f32 %v269, %v706
        %v736 = vadd.f32 %v270, %v709
        %v737 = vadd.f32 %v271, %v711
        %v738 = vadd.f32 %v272, %v714
        %v739 = vadd.f32 %v273, %v716
        %v740 = vadd.f32 %v274, %v719
        %v741 = vadd.f32 %v275, %v721
        %v742 = vadd.f32 %v276, %v724
        %v743 = vadd.f32 %v277, %v726
        %744 = vst [vmem:[%s261] sm:$0xff] %v728
        %745 = vst [vmem:[%s261 + $0x8] sm:$0xff] %v729
        %746 = vst [vmem:[%s261 + $0x10] sm:$0xff] %v730
        %747 = vst [vmem:[%s261 + $0x18] sm:$0xff] %v731
        %748 = vst [vmem:[%s261 + $0x20] sm:$0xff] %v732
        %749 = vst [vmem:[%s261 + $0x28] sm:$0xff] %v733
        %750 = vst [vmem:[%s261 + $0x30] sm:$0xff] %v734
        %751 = vst [vmem:[%s261 + $0x38] sm:$0xff] %v735
        %752 = vst [vmem:[%s261 + $0x40] sm:$0xff] %v736
        %753 = vst [vmem:[%s261 + $0x48] sm:$0xff] %v737
        %754 = vst [vmem:[%s261 + $0x50] sm:$0xff] %v738
        %755 = vst [vmem:[%s261 + $0x58] sm:$0xff] %v739
        %756 = vst [vmem:[%s261 + $0x60] sm:$0xff] %v740
        %757 = vst [vmem:[%s261 + $0x68] sm:$0xff] %v741
        %758 = vst [vmem:[%s261 + $0x70] sm:$0xff] %v742
        %759 = vst [vmem:[%s261 + $0x78] sm:$0xff] %v743
        %s760 = sand.u32 %s156, 1
        %s761 = scalar_lea.sflag [#allocation4], %s760
        %s762 = sand.u32 %s156, 1
        %s763 = smul.addr %s762, 128
        %s764 = scalar_lea.vmem [#allocation5], %s763
        // Predicated region
        $region45: #{tpu_custom_call.1} parent=39 // pred_check
          %p765 = pneg %p166
        $region46: #{tpu_custom_call.1} parent=39 // pred_check_branch
          %767 = sbr.rel (%p765) target = $region48
        $region47: #{tpu_custom_call.1} parent=39 // pred_region
          %769 = vsyncadd %s761, 0
          %s770 = smul.addr %s26, 16
          %s771 = sadd.s32 %s27, %s770
          %s772 = smul.addr %s771, 8
          %s773 = scalar_lea.hbm %s5, %s772
          %s774 = sshll.u32 %s764, 4
          %s775 = int_to_ptr.vmem [resolvable:$true] %s774
          %s776 = sshll.u32 %s773, 4
          %s777 = int_to_ptr.hbm [resolvable:$true] %s776
          %782 = dma.vmem_to_hbm [thread:$0]  %s775, 2048, %s777, %s761, 128, 128, 8
        $region48: #{tpu_custom_call.1} parent=39 // pred_fallthru
          _
      $region40: #{tpu_custom_call.1} parent=5 // pred_fallthru
        _
      %p783 = scmp.le.s32.totalorder 2, %s17
      // Predicated region
      $region49: #{tpu_custom_call.1} parent=5 // pred_check
        %p784 = pneg %p783
      $region50: #{tpu_custom_call.1} parent=5 // pred_check_branch
        %786 = sbr.rel (%p784) target = $region52
      $region51: #{tpu_custom_call.1} parent=5 // pred_region
        %s787 = ssub.s32 %s17, 2
        // Predicated region
        $region53: #{tpu_custom_call.1} parent=51 // pred_check
          %p788 = pneg %p172
        $region54: #{tpu_custom_call.1} parent=51 // pred_check_branch
          %790 = sbr.rel (%p788) target = $region56
        $region55: #{tpu_custom_call.1} parent=51 // pred_region
          %s791 = sand.u32 %s157, 1
          %s792 = scalar_lea.sflag [#allocation4], %s791
          %s793 = sand.u32 %s157, 1
          %s794 = smul.addr %s793, 128
          %s795 = scalar_lea.vmem [#allocation5], %s794
          %797 = dma.done %s792, 2048
        $region56: #{tpu_custom_call.1} parent=51 // pred_fallthru
          _
      $region52: #{tpu_custom_call.1} parent=5 // pred_fallthru
        _
    $region6: #{tpu_custom_call.1} parent=1 // loop_footer
      %s21 = sadd.s32 1, %s17
    $region7: #{tpu_custom_call.1} parent=1 // loop_footer_branch
      %16 = sbr.rel target = $region3
    $region8: #{tpu_custom_call.1} parent=1 // loop_exit
      _
    %798 = vsyncpa [#allocation3], 1
    %s799 = scalar_lea.sflag [#allocation3], 1
    %800 = vsyncpa %s799, 1
    %801 = vsyncpa [#allocation4], 1
    %s802 = scalar_lea.sflag [#allocation4], 1
    %803 = vsyncpa %s802, 1

</llo_original>
